<compile_context>
chip_gen: v7x
topology: tpu7x:2x2x1
jax: 0.10.0
libtpu: 0.0.40
codegen_flags: <defaults>
</compile_context>

<pallas_src>
import jax
import jax.numpy as jnp
from jax.experimental import pallas as pl
from jax.experimental.pallas import tpu as pltpu


def _round_up(x, m):
    return (x + m - 1) // m * m


def _default_batch_tile():
    # v5e's MXU is 4x128^2 -> M=128 already fills it; v6e/v7x (2x256^2) prefer 256.
    try:
        kind = jax.devices()[0].device_kind.lower()
        if "v5" in kind:
            return 128
    except Exception:
        pass
    return 256


def _vmem_capacity_bytes():
    try:
        return int(pltpu.get_tpu_info().vmem_capacity_bytes)
    except Exception:
        return 64 * 1024 * 1024  # v7x worst case per TensorCore


def mlp_kernel(x_ref, w1_ref, b1_ref, w2_ref, b2_ref, o_ref):
    # fc1 on the MXU: bf16 operands, f32 accumulation.
    x = x_ref[...].astype(w1_ref.dtype)  # no-op if the wrapper already cast x
    h = jnp.dot(x, w1_ref[...], preferred_element_type=jnp.float32)
    # Bias + ReLU directly on the f32 accumulator (single VPU pass).
    h = jnp.maximum(h + b1_ref[...], 0.0)
    # fc2 on the MXU: downcast h to bf16 for the MXU, keep f32 accumulation.
    y = jnp.dot(h.astype(w2_ref.dtype), w2_ref[...],
                preferred_element_type=jnp.float32)
    # Single cast at the store.
    o_ref[...] = (y + b2_ref[...]).astype(o_ref.dtype)


def prepare_params(w1, b1, w2, b2, *, compute_dtype=jnp.bfloat16):
    """One-time weight prep (cast + lane-dense padding), hoisted out of forward."""
    K, H = w1.shape
    H2, N = w2.shape
    assert H == H2 and b1.shape == (H,) and b2.shape == (N,)
    f32 = jnp.float32
    K_p, H_p, N_p = (_round_up(d, 128) for d in (K, H, N))
    return dict(
        dims=(K, H, N),
        padded_dims=(K_p, H_p, N_p),
        compute_dtype=compute_dtype,
        # Unpadded copies (small-shape fast path).
        w1=w1.astype(compute_dtype),
        b1=b1.astype(f32).reshape(1, H),
        w2=w2.astype(compute_dtype),
        b2=b2.astype(f32).reshape(1, N),
        # Lane-dense padded copies (large-shape tiled path); padded columns of
        # h are ReLU(0 + 0) = 0 and padded rows of W2 are 0, so the valid
        # output block is identical to the unpadded computation.
        w1_p=jnp.zeros((K_p, H_p), compute_dtype).at[:K, :H].set(w1.astype(compute_dtype)),
        b1_p=jnp.zeros((1, H_p), f32).at[0, :H].set(b1.astype(f32)),
        w2_p=jnp.zeros((H_p, N_p), compute_dtype).at[:H, :N].set(w2.astype(compute_dtype)),
        b2_p=jnp.zeros((1, N_p), f32).at[0, :N].set(b2.astype(f32)),
    )


def simple_nn_forward(params, x, *, batch_tile=None):
    """x: (B, in). Returns (B, out) in x.dtype."""
    B, K = x.shape
    K0, H, N = params["dims"]
    assert K == K0
    cdt = params["compute_dtype"]
    cbytes = jnp.dtype(cdt).itemsize

    # Cost estimate from TRUE shapes and post-cast element sizes (advisory).
    cost = pl.CostEstimate(
        flops=2 * B * (K * H + H * N),
        transcendentals=0,
        bytes_accessed=(B * K + K * H + H * N) * cbytes
        + (H + N) * 4
        + B * N * x.dtype.itemsize,
    )

    # ---------- Small-shape fast path: no padding, one grid step, no slice. ----------
    if B <= 128 and max(K, H, N) <= 512:
        return pl.pallas_call(
            mlp_kernel,
            out_shape=jax.ShapeDtypeStruct((B, N), x.dtype),
            grid=(1,),
            in_specs=[
                pl.BlockSpec((B, K), lambda i: (0, 0)),
                pl.BlockSpec((K, H), lambda i: (0, 0)),
                pl.BlockSpec((1, H), lambda i: (0, 0)),
                pl.BlockSpec((H, N), lambda i: (0, 0)),
                pl.BlockSpec((1, N), lambda i: (0, 0)),
            ],
            out_specs=pl.BlockSpec((B, N), lambda i: (0, 0)),
            compiler_params=pltpu.CompilerParams(
                dimension_semantics=("arbitrary",)),
            cost_estimate=cost,
        )(x, params["w1"], params["b1"], params["w2"], params["b2"])

    # ---------- Large-shape tiled path: lane-dense padding + batch grid. ----------
    K_p, H_p, N_p = params["padded_dims"]
    # Weights + biases must stay VMEM-resident across the batch grid.
    weight_bytes = (K_p * H_p + H_p * N_p) * cbytes + (H_p + N_p) * 4
    budget = int(_vmem_capacity_bytes() * 0.75)  # headroom for Mosaic scratch
    # TODO(synk): if weight_bytes alone exceeds `budget`, switch to the
    # reduction-grid-axis scheme described in the header instead of residency.

    def tile_bytes(tb):
        # x and out tiles are double-buffered by the Pallas pipeline.
        return 2 * tb * (K_p * cbytes + N_p * x.dtype.itemsize)

    TB = batch_tile or _default_batch_tile()
    while TB > 128 and weight_bytes + tile_bytes(TB) > budget:
        TB //= 2
    TB = min(TB, _round_up(B, 8))
    B_p = _round_up(B, TB)
    # Prefer >=2 grid steps (megacore sharding + pipelining) when B allows.
    while B_p // TB < 2 and TB > 128:
        TB = max(128, _round_up(TB // 2, 8))
        B_p = _round_up(B, TB)

    x_p = jnp.zeros((B_p, K_p), cdt).at[:B, :K].set(x.astype(cdt))
    vmem_limit = min(weight_bytes + tile_bytes(TB) + (8 << 20), budget)

    out_p = pl.pallas_call(
        mlp_kernel,
        out_shape=jax.ShapeDtypeStruct((B_p, N_p), x.dtype),
        grid=(B_p // TB,),
        in_specs=[
            pl.BlockSpec((TB, K_p), lambda i: (i, 0)),    # x: tiled over batch
            pl.BlockSpec((K_p, H_p), lambda i: (0, 0)),   # W1: VMEM-resident
            pl.BlockSpec((1, H_p), lambda i: (0, 0)),     # b1: VMEM-resident
            pl.BlockSpec((H_p, N_p), lambda i: (0, 0)),   # W2: VMEM-resident
            pl.BlockSpec((1, N_p), lambda i: (0, 0)),     # b2: VMEM-resident
        ],
        out_specs=pl.BlockSpec((TB, N_p), lambda i: (i, 0)),
        compiler_params=pltpu.CompilerParams(
            dimension_semantics=("parallel",),
            vmem_limit_bytes=int(vmem_limit),
        ),
        cost_estimate=cost,
    )(x_p, params["w1_p"], params["b1_p"], params["w2_p"], params["b2_p"])

    return out_p[:B, :N]


def reference_forward(x, w1, b1, w2, b2):
    h = jnp.maximum(x @ w1 + b1, 0.0)
    return h @ w2 + b2


if __name__ == "__main__":
    # Small shapes consistent with the module: batch=8, input=32, hidden=64, output=16.
    batch, input_size, hidden_size, output_size = 8, 32, 64, 16

    key = jax.random.PRNGKey(0)
    kx, kw1, kb1, kw2, kb2 = jax.random.split(key, 5)

    x = jax.random.normal(kx, (batch, input_size), dtype=jnp.float32)

    # Deterministic init mimicking nn.Linear's uniform(-1/sqrt(fan_in), 1/sqrt(fan_in)).
    # PyTorch stores weight as (out, in); we generate the transposed (in, out)
    # layout directly so the math is x @ W.
    lim1 = 1.0 / jnp.sqrt(jnp.float32(input_size))
    lim2 = 1.0 / jnp.sqrt(jnp.float32(hidden_size))
    w1 = jax.random.uniform(kw1, (input_size, hidden_size), jnp.float32, -lim1, lim1)
    b1 = jax.random.uniform(kb1, (hidden_size,), jnp.float32, -lim1, lim1)
    w2 = jax.random.uniform(kw2, (hidden_size, output_size), jnp.float32, -lim2, lim2)
    b2 = jax.random.uniform(kb2, (output_size,), jnp.float32, -lim2, lim2)

    params = prepare_params(w1, b1, w2, b2)          # one-time pad + bf16 cast
    out = simple_nn_forward(params, x)
    out = jax.block_until_ready(out)

    ref = reference_forward(x, w1, b1, w2, b2)       # f32 reference
    assert out.shape == (batch, output_size)
    # bf16 MXU inputs with f32 accumulation -> relaxed tolerance vs f32 reference.
    assert jnp.allclose(out, ref, atol=2e-2, rtol=2e-2), "mismatch vs JAX reference"

    print("KERNEL_OK")
</pallas_src>

<mosaic_0001>
module attributes {stable_mosaic.version = 11 : i64} {
  func.func @mlp_kernel(%arg0: i32, %arg1: memref<8x32xf32, #tpu.memory_space<vmem>>, %arg2: memref<32x64xbf16, #tpu.memory_space<vmem>>, %arg3: memref<1x64xf32, #tpu.memory_space<vmem>>, %arg4: memref<64x16xbf16, #tpu.memory_space<vmem>>, %arg5: memref<1x16xf32, #tpu.memory_space<vmem>>, %arg6: memref<8x16xf32, #tpu.memory_space<vmem>>) attributes {dimension_semantics = [#tpu.dimension_semantics<arbitrary>], iteration_bounds = array<i64: 1>, scalar_prefetch = 0 : i64, scratch_operands = 0 : i64, tpu.core_type = #tpu.core_type<tc>, window_params = [{pipeline_mode = #tpu.pipeline_mode<synchronous>, transform_indices = @transform_0, window_bounds = array<i64: 8, 32>}, {pipeline_mode = #tpu.pipeline_mode<synchronous>, transform_indices = @transform_1, window_bounds = array<i64: 32, 64>}, {pipeline_mode = #tpu.pipeline_mode<synchronous>, transform_indices = @transform_2, window_bounds = array<i64: 1, 64>}, {pipeline_mode = #tpu.pipeline_mode<synchronous>, transform_indices = @transform_3, window_bounds = array<i64: 64, 16>}, {pipeline_mode = #tpu.pipeline_mode<synchronous>, transform_indices = @transform_4, window_bounds = array<i64: 1, 16>}, {pipeline_mode = #tpu.pipeline_mode<synchronous>, transform_indices = @transform_5, window_bounds = array<i64: 8, 16>}]} {
    %c0 = arith.constant 0 : index
    %c0_0 = arith.constant 0 : index
    %0 = vector.load %arg1[%c0, %c0_0] : memref<8x32xf32, #tpu.memory_space<vmem>>, vector<8x32xf32>
    %1 = arith.truncf %0 : vector<8x32xf32> to vector<8x32xbf16>
    %c0_1 = arith.constant 0 : index
    %c0_2 = arith.constant 0 : index
    %2 = vector.load %arg2[%c0_1, %c0_2] : memref<32x64xbf16, #tpu.memory_space<vmem>>, vector<32x64xbf16>
    %cst = arith.constant dense<0.000000e+00> : vector<8x64xf32>
    %3 = tpu.matmul %1, %2, %cst {dimension_numbers = #tpu.dot_dimension_numbers<[1], [0], [0], [1], [0, 0, 1, 1], [], []>} : vector<8x32xbf16>, vector<32x64xbf16>, vector<8x64xf32> -> vector<8x64xf32>
    %c0_3 = arith.constant 0 : index
    %c0_4 = arith.constant 0 : index
    %4 = vector.load %arg3[%c0_3, %c0_4] : memref<1x64xf32, #tpu.memory_space<vmem>>, vector<1x64xf32>
    %5 = vector.broadcast %4 : vector<1x64xf32> to vector<8x64xf32>
    %6 = arith.addf %3, %5 : vector<8x64xf32>
    %cst_5 = arith.constant 0.000000e+00 : f32
    %7 = vector.broadcast %cst_5 : f32 to vector<8x64xf32>
    %8 = arith.maximumf %6, %7 : vector<8x64xf32>
    %9 = arith.truncf %8 : vector<8x64xf32> to vector<8x64xbf16>
    %c0_6 = arith.constant 0 : index
    %c0_7 = arith.constant 0 : index
    %10 = vector.load %arg4[%c0_6, %c0_7] : memref<64x16xbf16, #tpu.memory_space<vmem>>, vector<64x16xbf16>
    %cst_8 = arith.constant dense<0.000000e+00> : vector<8x16xf32>
    %11 = tpu.matmul %9, %10, %cst_8 {dimension_numbers = #tpu.dot_dimension_numbers<[1], [0], [0], [1], [0, 0, 1, 1], [], []>} : vector<8x64xbf16>, vector<64x16xbf16>, vector<8x16xf32> -> vector<8x16xf32>
    %c0_9 = arith.constant 0 : index
    %c0_10 = arith.constant 0 : index
    %12 = vector.load %arg5[%c0_9, %c0_10] : memref<1x16xf32, #tpu.memory_space<vmem>>, vector<1x16xf32>
    %13 = vector.broadcast %12 : vector<1x16xf32> to vector<8x16xf32>
    %14 = arith.addf %11, %13 : vector<8x16xf32>
    %c0_11 = arith.constant 0 : index
    %c0_12 = arith.constant 0 : index
    %15 = vector.load %arg6[%c0_11, %c0_12] : memref<8x16xf32, #tpu.memory_space<vmem>>, vector<8x16xf32>
    tpu.vector_store %arg6[%c0_11, %c0_12], %14 {strides = array<i32>} : memref<8x16xf32, #tpu.memory_space<vmem>>, vector<8x16xf32>,
    return
  }
  func.func @transform_0(%arg0: i32) -> (i32, i32) {
    %c0_i32 = arith.constant 0 : i32
    %c0_i32_0 = arith.constant 0 : i32
    %c0_i32_1 = arith.constant 0 : i32
    return %c0_i32, %c0_i32_0 : i32, i32
  }
  func.func @transform_1(%arg0: i32) -> (i32, i32) {
    %c0_i32 = arith.constant 0 : i32
    %c0_i32_0 = arith.constant 0 : i32
    %c0_i32_1 = arith.constant 0 : i32
    return %c0_i32, %c0_i32_0 : i32, i32
  }
  func.func @transform_2(%arg0: i32) -> (i32, i32) {
    %c0_i32 = arith.constant 0 : i32
    %c0_i32_0 = arith.constant 0 : i32
    %c0_i32_1 = arith.constant 0 : i32
    return %c0_i32, %c0_i32_0 : i32, i32
  }
  func.func @transform_3(%arg0: i32) -> (i32, i32) {
    %c0_i32 = arith.constant 0 : i32
    %c0_i32_0 = arith.constant 0 : i32
    %c0_i32_1 = arith.constant 0 : i32
    return %c0_i32, %c0_i32_0 : i32, i32
  }
  func.func @transform_4(%arg0: i32) -> (i32, i32) {
    %c0_i32 = arith.constant 0 : i32
    %c0_i32_0 = arith.constant 0 : i32
    %c0_i32_1 = arith.constant 0 : i32
    return %c0_i32, %c0_i32_0 : i32, i32
  }
  func.func @transform_5(%arg0: i32) -> (i32, i32) {
    %c0_i32 = arith.constant 0 : i32
    %c0_i32_0 = arith.constant 0 : i32
    %c0_i32_1 = arith.constant 0 : i32
    return %c0_i32, %c0_i32_0 : i32, i32
  }
}

</mosaic_0001>

<llo_original>
// kernel: tpu_custom_call.1
$region0: #{tpu_custom_call.1}
  #allocation0 [shape = 'u32[]', space=smem, size = 0x4, offset = 0x4, fixed_abs, tag = 'smem constant byte address 0x4 - core index']
  #allocation1 [shape = 'u32[144,128]{1,0:T(1,128)}', space=vmem, size = 0x12000, scoped, tag = 'internal scratch']
  %s0 = inlined_call_operand.vmem [shape: f32[8,32], index: 0, kind: input, shape index: {}]
  %s1 = inlined_call_operand.vmem [shape: bf16[32,64], index: 1, kind: input, shape index: {}]
  %s2 = inlined_call_operand.vmem [shape: f32[1,64], index: 2, kind: input, shape index: {}]
  %s3 = inlined_call_operand.vmem [shape: bf16[64,16], index: 3, kind: input, shape index: {}]
  %s4 = inlined_call_operand.vmem [shape: f32[1,16], index: 4, kind: input, shape index: {}]
  %s5 = inlined_call_operand.hbm [shape: f32[8,16], index: 5, kind: output, shape index: {}]
  %s6 = sld [smem:[#allocation0]]
  $region30: #{tpu_custom_call.1} parent=0
    _
  %s8 = ssub.s32 1, %s6
  %s9 = scalar_select 0, %s8, %s6
  $region1: #{tpu_custom_call.1} parent=0
    #allocation2 [shape = 'u8[4096]{0}', space=vmem, size = 0x1000, scoped, tag = 'output window, operand 0, single buffered']
    #allocation3 [shape = 's32[1]{0}', space=sflag, size = 0x4, scoped, tag = 'scoped memory for tpu_custom_call.1']
    %10 = vsyncpa [#allocation3], 0
    // Predicated region
    $region2: #{tpu_custom_call.1} parent=1 // pred_check
      _
    $region3: #{tpu_custom_call.1} parent=1 // pred_check_branch
      %12 = sbr.rel (0) target = $region5
    $region4: #{tpu_custom_call.1} parent=1 // pred_region
      _
    $region5: #{tpu_custom_call.1} parent=1 // pred_fallthru
      _
    // Predicated region
    $region6: #{tpu_custom_call.1} parent=1 // pred_check
      _
    $region7: #{tpu_custom_call.1} parent=1 // pred_check_branch
      %14 = sbr.rel (0) target = $region9
    $region8: #{tpu_custom_call.1} parent=1 // pred_region
      _
    $region9: #{tpu_custom_call.1} parent=1 // pred_fallthru
      _
    // Predicated region
    $region10: #{tpu_custom_call.1} parent=1 // pred_check
      _
    $region11: #{tpu_custom_call.1} parent=1 // pred_check_branch
      %16 = sbr.rel (0) target = $region13
    $region12: #{tpu_custom_call.1} parent=1 // pred_region
      _
    $region13: #{tpu_custom_call.1} parent=1 // pred_fallthru
      _
    // Predicated region
    $region14: #{tpu_custom_call.1} parent=1 // pred_check
      _
    $region15: #{tpu_custom_call.1} parent=1 // pred_check_branch
      %18 = sbr.rel (0) target = $region17
    $region16: #{tpu_custom_call.1} parent=1 // pred_region
      _
    $region17: #{tpu_custom_call.1} parent=1 // pred_fallthru
      _
    // Predicated region
    $region18: #{tpu_custom_call.1} parent=1 // pred_check
      _
    $region19: #{tpu_custom_call.1} parent=1 // pred_check_branch
      %20 = sbr.rel (0) target = $region21
    $region20: #{tpu_custom_call.1} parent=1 // pred_region
      _
    $region21: #{tpu_custom_call.1} parent=1 // pred_fallthru
      _
    %v22 = vld [vmem:[%s0] sm:$0xff]
    %v23 = vpack.c.bf16 %v22, %v22
    %v24 = vld [vmem:[%s1] sm:$0xf]
    %v25 = vld [vmem:[%s1 + $0x4] sm:$0xf]
    %v26 = vld [vmem:[%s1 + $0x8] sm:$0xf]
    %v27 = vld [vmem:[%s1 + $0xc] sm:$0xf]
    %v28 = vld [vmem:[%s2] sm:$0x1]
    %v30 = vlaneseq
    %v31 = vshrl.u32 %v30, 7
    %v32 = vsub.s32 0, %v31
    %v33 = vrot.slane %v28, %v32
    %v39 = vunpack.c.l.b16 %v24
    %v40 = vunpack.c.l.b16 %v25
    %v41 = vunpack.c.l.b16 %v26
    %v42 = vunpack.c.l.b16 %v27
    %v43 = vpack.c.b16 %v40, %v39
    %v44 = vpack.c.b16 %v42, %v41
    %vm47 = vcmask 261120
    %v49 = vsel %vm47, %v23, 0
    %51 = vmatprep.subr.bf16.mxu0 0
    %52 = vmatpush1.bf16.msra.mxu0 %v43
    %53 = vmatprep.subr.bf16.mxu0 0
    %54 = vmatpush1.bf16.msra.mxu0 %v44
    %55 = vmatprep.subr.bf16.mxu0 0
    %56 = vmatpush1.bf16.msra.mxu0 0
    %57 = vmatprep.subr.bf16.mxu0 0
    %58 = vmatpush1.bf16.msra.mxu0 0
    %59 = vmatprep.subr.bf16.mxu0 0
    %60 = vmatpush1.bf16.msra.mxu0 0
    %61 = vmatprep.subr.bf16.mxu0 0
    %62 = vmatpush1.bf16.msra.mxu0 0
    %63 = vmatprep.subr.bf16.mxu0 0
    %64 = vmatpush1.bf16.msra.mxu0 0
    %65 = vmatprep.subr.bf16.mxu0 0
    %66 = vmatpush1.bf16.msra.mxu0 0
    %67 = vmatprep.subr.bf16.mxu0 0
    %68 = vmatpush1.bf16.msra.mxu0 0
    %69 = vmatprep.subr.bf16.mxu0 0
    %70 = vmatpush1.bf16.msra.mxu0 0
    %71 = vmatprep.subr.bf16.mxu0 0
    %72 = vmatpush1.bf16.msra.mxu0 0
    %73 = vmatprep.subr.bf16.mxu0 0
    %74 = vmatpush1.bf16.msra.mxu0 0
    %75 = vmatprep.subr.bf16.mxu0 0
    %76 = vmatpush1.bf16.msra.mxu0 0
    %77 = vmatprep.subr.bf16.mxu0 0
    %78 = vmatpush1.bf16.msra.mxu0 0
    %79 = vmatprep.subr.bf16.mxu0 0
    %80 = vmatpush1.bf16.msra.mxu0 0
    %81 = vmatprep.subr.bf16.mxu0 0
    %82 = vmatpush1.bf16.msra.mxu0 0
    %83 = vmatprep.mubr.bf16.mxu0 0
    %84 = vmatmul.mubr.bf16.gmra.mrb[0].mxu0 %v49
    %v85 = vpop.f32.mrb[0].mxu0
    %v86 = vadd.f32 %v33, %v85
    %v87 = vpop.f32.mrb[0].mxu0
    %v88 = vpop.f32.mrb[0].mxu0
    %v89 = vpop.f32.mrb[0].mxu0
    %90 = vdwg.mxu0
    %v91 = vmax.f32 %v86, 0.0
    %v92 = vpack.c.bf16 %v91, %v91
    %v93 = vld [vmem:[%s3] sm:$0xf]
    %v94 = vld [vmem:[%s3 + $0x4] sm:$0xf]
    %v95 = vld [vmem:[%s3 + $0x8] sm:$0xf]
    %v96 = vld [vmem:[%s3 + $0xc] sm:$0xf]
    %v97 = vld [vmem:[%s3 + $0x10] sm:$0xf]
    %v98 = vld [vmem:[%s3 + $0x14] sm:$0xf]
    %v99 = vld [vmem:[%s3 + $0x18] sm:$0xf]
    %v100 = vld [vmem:[%s3 + $0x1c] sm:$0xf]
    %v101 = vld [vmem:[%s4] sm:$0x1]
    %v103 = vlaneseq
    %v104 = vshrl.u32 %v103, 7
    %v105 = vsub.s32 0, %v104
    %v106 = vrot.slane %v101, %v105
    %v116 = vunpack.c.l.b16 %v93
    %v117 = vunpack.c.l.b16 %v94
    %v118 = vunpack.c.l.b16 %v95
    %v119 = vunpack.c.l.b16 %v96
    %v120 = vunpack.c.l.b16 %v97
    %v121 = vunpack.c.l.b16 %v98
    %v122 = vunpack.c.l.b16 %v99
    %v123 = vunpack.c.l.b16 %v100
    %v124 = vpack.c.b16 %v117, %v116
    %v125 = vpack.c.b16 %v119, %v118
    %v126 = vpack.c.b16 %v121, %v120
    %v127 = vpack.c.b16 %v123, %v122
    %vm132 = vcmask 523264
    %v134 = vsel %vm132, %v92, 0
    %136 = vmatprep.subr.bf16.mxu0 0
    %137 = vmatpush1.bf16.msra.mxu0 %v124
    %138 = vmatprep.subr.bf16.mxu0 0
    %139 = vmatpush1.bf16.msra.mxu0 %v125
    %140 = vmatprep.subr.bf16.mxu0 0
    %141 = vmatpush1.bf16.msra.mxu0 %v126
    %142 = vmatprep.subr.bf16.mxu0 0
    %143 = vmatpush1.bf16.msra.mxu0 %v127
    %144 = vmatprep.subr.bf16.mxu0 0
    %145 = vmatpush1.bf16.msra.mxu0 0
    %146 = vmatprep.subr.bf16.mxu0 0
    %147 = vmatpush1.bf16.msra.mxu0 0
    %148 = vmatprep.subr.bf16.mxu0 0
    %149 = vmatpush1.bf16.msra.mxu0 0
    %150 = vmatprep.subr.bf16.mxu0 0
    %151 = vmatpush1.bf16.msra.mxu0 0
    %152 = vmatprep.subr.bf16.mxu0 0
    %153 = vmatpush1.bf16.msra.mxu0 0
    %154 = vmatprep.subr.bf16.mxu0 0
    %155 = vmatpush1.bf16.msra.mxu0 0
    %156 = vmatprep.subr.bf16.mxu0 0
    %157 = vmatpush1.bf16.msra.mxu0 0
    %158 = vmatprep.subr.bf16.mxu0 0
    %159 = vmatpush1.bf16.msra.mxu0 0
    %160 = vmatprep.subr.bf16.mxu0 0
    %161 = vmatpush1.bf16.msra.mxu0 0
    %162 = vmatprep.subr.bf16.mxu0 0
    %163 = vmatpush1.bf16.msra.mxu0 0
    %164 = vmatprep.subr.bf16.mxu0 0
    %165 = vmatpush1.bf16.msra.mxu0 0
    %166 = vmatprep.subr.bf16.mxu0 0
    %167 = vmatpush1.bf16.msra.mxu0 0
    %168 = vmatprep.mubr.bf16.mxu0 0
    %169 = vmatmul.mubr.bf16.gmra.mrb[0].mxu0 %v134
    %v170 = vpop.f32.mrb[0].mxu0
    %v171 = vadd.f32 %v106, %v170
    %v172 = vpop.f32.mrb[0].mxu0
    %v173 = vpop.f32.mrb[0].mxu0
    %v174 = vpop.f32.mrb[0].mxu0
    %175 = vdwg.mxu0
    %vm176 = vcmask 130048
    %177 = vst.msk [vmem:[#allocation2] sm:$0xff] %vm176, %v171
    // Predicated region
    $region22: #{tpu_custom_call.1} parent=1 // pred_check
      _
    $region23: #{tpu_custom_call.1} parent=1 // pred_check_branch
      %179 = sbr.rel (0) target = $region25
    $region24: #{tpu_custom_call.1} parent=1 // pred_region
      %s181 = ssub.s32 128, 128
      %182 = vsyncadd [#allocation3], %s181
      %s184 = sshll.u32 [#allocation2], 4
      %s185 = int_to_ptr.vmem [resolvable:$true] %s184
      %187 = dma.vmem_to_hbm [thread:$0]  %s185, 128, %s5, [#allocation3]
    $region25: #{tpu_custom_call.1} parent=1 // pred_fallthru
      _
    // Predicated region
    $region26: #{tpu_custom_call.1} parent=1 // pred_check
      _
    $region27: #{tpu_custom_call.1} parent=1 // pred_check_branch
      %189 = sbr.rel (0) target = $region29
    $region28: #{tpu_custom_call.1} parent=1 // pred_region
      %190 = dma.done [#allocation3], 128
    $region29: #{tpu_custom_call.1} parent=1 // pred_fallthru
      _
    %191 = vsyncpa [#allocation3], 1

</llo_original>
